<compile_context>
chip_gen: v7x
topology: tpu7x:2x2x1
jax: 0.10.0
libtpu: 0.0.40
codegen_flags: <defaults>
</compile_context>

<pallas_src>
import jax
import jax.numpy as jnp
from jax import lax
from jax.experimental import pallas as pl
from jax.experimental.pallas import tpu as pltpu

EPS = 1e-5


def _round_up(x, m):
    return (x + m - 1) // m * m


def _pick_row_tiling(N, target):
    """Pick (tile_n, N_pad, n_tiles) so the output slice is a no-op whenever possible.

    Multi-tile row blocks must be a multiple of 16 sublanes (bf16 in-kernel operands);
    a single full-extent block is exempt from the (8,128) rule, so small N needs no
    padding at all.  Only a ragged N (or one with no decent divisor) pays pad + slice.
    """
    target = max(16, (target // 16) * 16)
    if N <= target:
        return N, N, 1                       # one full-extent block, no padding
    if N % 16 == 0:
        t = target
        while N % t != 0:                    # largest multiple-of-16 divisor <= target
            t -= 16
        if t >= 512:                         # good divisor -> no padding, no output copy
            return t, N, N // t
    # Fallback (ragged N or only tiny divisors): pad rows (mask = 0 there) and slice once.
    t = target
    N_pad = _round_up(N, t)
    return t, N_pad, N_pad // t


def _stats_kernel(x_ref, w_ref, mask_ref, sum_ref, sumsq_ref):
    # Resident (1, F) accumulators, one per outer 'parallel' group, accumulated
    # across the inner 'arbitrary' row-tile axis.
    @pl.when(pl.program_id(1) == 0)
    def _():
        sum_ref[...] = jnp.zeros_like(sum_ref)
        sumsq_ref[...] = jnp.zeros_like(sumsq_ref)

    # Fold the {0,1} mask into x before the matmul (mask width C_in, not F), then
    # bf16 MXU matmul with f32 accumulation.  Bias is excluded here (added to the
    # mean later): variance is shift-invariant.
    xm = x_ref[...].astype(jnp.bfloat16) * mask_ref[...]
    zm = jnp.dot(xm, w_ref[...], preferred_element_type=jnp.float32)
    sum_ref[...] += jnp.sum(zm, axis=0, keepdims=True)
    sumsq_ref[...] += jnp.sum(zm * zm, axis=0, keepdims=True)


def _norm_kernel(x_ref, w_ref, b_ref, mask_ref, scale_ref, shift_ref, o_ref):
    # Recompute fc (C_in is tiny; cheaper than writing + re-reading an (N, F) f32 slab).
    y = jnp.dot(x_ref[...].astype(jnp.bfloat16), w_ref[...],
                preferred_element_type=jnp.float32) + b_ref[...]
    m = mask_ref[...] > 0                                # (tile_n, 1) bool
    normed = y * scale_ref[...] + shift_ref[...]         # folded affine: 1 FMA / element
    out = jnp.where(m, normed, y)                        # masked_scatter semantics
    o_ref[...] = jnp.maximum(out, 0.0).astype(o_ref.dtype)


def intermediate_block(x, mask, w, b, gamma, beta, *, tile_n=2048,
                       out_dtype=jnp.float32):
    """x: (B, T, C_in), mask: (B, T) (>0 == valid).
    w: (C_in, F), b/gamma/beta: (F,). Returns (B, T, F) in out_dtype."""
    B, T, C_in = x.shape
    F = w.shape[1]
    N = B * T

    tn, N_pad, n_tiles = _pick_row_tiling(N, tile_n)

    # x stays unpadded: the reshape is a free view, no wrapper-side copy / cast of x.
    x2d = x.reshape(N, C_in)
    mask2d = (mask.reshape(N, 1) > 0).astype(jnp.bfloat16)
    if N_pad != N:
        # Only for ragged N: pad rows (mask = 0 there, so they never touch the stats).
        x2d = jnp.pad(x2d, ((0, N_pad - N), (0, 0)))
        mask2d = jnp.pad(mask2d, ((0, N_pad - N), (0, 0)))

    w_bf = w.astype(jnp.bfloat16)
    b2d = b.reshape(1, F).astype(jnp.float32)

    # v7x megacore: split pass 1 over two groups of row tiles (one per TensorCore);
    # per-group partials live side by side in the lane dim so each keeps a legal
    # (1, F) block.  n_groups == 1 on odd tile counts / single-tile runs.
    n_groups = 2 if (n_tiles % 2 == 0 and n_tiles >= 2) else 1
    tpg = n_tiles // n_groups

    # ---- pass 1: masked sum / sum-of-squares, accumulated across row tiles ----
    sum_p, sumsq_p = pl.pallas_call(
        _stats_kernel,
        out_shape=(jax.ShapeDtypeStruct((1, n_groups * F), jnp.float32),
                   jax.ShapeDtypeStruct((1, n_groups * F), jnp.float32)),
        grid_spec=pltpu.PrefetchScalarGridSpec(
            num_scalar_prefetch=0,
            grid=(n_groups, tpg),
            in_specs=[
                pl.BlockSpec((tn, C_in), lambda g, i: (g * tpg + i, 0)),  # x tile
                pl.BlockSpec((C_in, F), lambda g, i: (0, 0)),             # w (resident)
                pl.BlockSpec((tn, 1), lambda g, i: (g * tpg + i, 0)),     # mask tile
            ],
            out_specs=[pl.BlockSpec((1, F), lambda g, i: (0, g)),
                       pl.BlockSpec((1, F), lambda g, i: (0, g))],
        ),
        compiler_params=pltpu.CompilerParams(
            dimension_semantics=("parallel", "arbitrary")),
    )(x2d, w_bf, mask2d)

    # ---- tiny (1, F) finalize in plain JAX ----
    count = jnp.sum((mask.reshape(-1) > 0).astype(jnp.float32))
    count_safe = jnp.maximum(count, 1.0)                 # guard count == 0 -> no NaNs
    sum_z = jnp.sum(sum_p.reshape(n_groups, F), axis=0, keepdims=True)
    sumsq_z = jnp.sum(sumsq_p.reshape(n_groups, F), axis=0, keepdims=True)
    mean_z = sum_z / count_safe
    # TODO(synk): E[z^2]-E[z]^2 in f32 can cancel catastrophically if |mean| >> std;
    #             a shifted-mean / Welford combine would be needed for extreme scales.
    var = jnp.maximum(sumsq_z / count_safe - mean_z * mean_z, 0.0)
    mean = mean_z + b2d                                  # bias folded back into the mean
    scale = gamma.reshape(1, F).astype(jnp.float32) * lax.rsqrt(var + EPS)
    shift = beta.reshape(1, F).astype(jnp.float32) - mean * scale

    # ---- pass 2: fc + folded normalize + ReLU, row-tile parallel ----
    out2d = pl.pallas_call(
        _norm_kernel,
        out_shape=jax.ShapeDtypeStruct((N_pad, F), out_dtype),
        grid_spec=pltpu.PrefetchScalarGridSpec(
            num_scalar_prefetch=0,
            grid=(n_tiles,),
            in_specs=[
                pl.BlockSpec((tn, C_in), lambda i: (i, 0)),   # x tile (f32, unpadded C)
                pl.BlockSpec((C_in, F), lambda i: (0, 0)),    # w (resident)
                pl.BlockSpec((1, F), lambda i: (0, 0)),       # bias
                pl.BlockSpec((tn, 1), lambda i: (i, 0)),      # mask tile
                pl.BlockSpec((1, F), lambda i: (0, 0)),       # scale
                pl.BlockSpec((1, F), lambda i: (0, 0)),       # shift
            ],
            out_specs=pl.BlockSpec((tn, F), lambda i: (i, 0)),
        ),
        compiler_params=pltpu.CompilerParams(dimension_semantics=("parallel",)),
    )(x2d, w_bf, b2d, mask2d, scale, shift)

    if N_pad != N:
        out2d = out2d[:N]
    return out2d.reshape(B, T, F)


def reference_jax(x, mask, w, b, gamma, beta):
    """Pure-f32 reference matching PyTorch training-mode MaskedNorm(sync_batch)."""
    B, T, C_in = x.shape
    F = w.shape[1]
    y = x.reshape(-1, C_in) @ w + b[None, :]
    m = (mask.reshape(-1, 1) > 0).astype(jnp.float32)
    count = jnp.sum(m)
    mean = jnp.sum(y * m, axis=0, keepdims=True) / count
    var = jnp.sum(((y - mean) * m) ** 2, axis=0, keepdims=True) / count
    normed = gamma[None, :] * (y - mean) / jnp.sqrt(var + EPS) + beta[None, :]
    out = jnp.where(m > 0, normed, y)
    return jnp.maximum(out, 0.0).reshape(B, T, F)


if __name__ == "__main__":
    B, T, C_in, F = 2, 8, 32, 512

    key = jax.random.PRNGKey(0)
    kx, kw, kb, kg, kbe = jax.random.split(key, 5)

    x = jax.random.normal(kx, (B, T, C_in), dtype=jnp.float32)
    bound = 1.0 / (C_in ** 0.5)
    w = jax.random.uniform(kw, (C_in, F), minval=-bound, maxval=bound, dtype=jnp.float32)
    b = jax.random.uniform(kb, (F,), minval=-bound, maxval=bound, dtype=jnp.float32)
    gamma = 1.0 + 0.1 * jax.random.normal(kg, (F,), dtype=jnp.float32)
    beta = 0.1 * jax.random.normal(kbe, (F,), dtype=jnp.float32)
    # mask: per-sequence valid lengths (at least one valid position)
    lengths = jnp.array([T, T // 2], dtype=jnp.int32)
    mask = (jnp.arange(T)[None, :] < lengths[:, None]).astype(jnp.int32)

    out = intermediate_block(x, mask, w, b, gamma, beta)
    out = jax.block_until_ready(out)

    ref = reference_jax(x, mask, w, b, gamma, beta)
    assert out.shape == (B, T, F)
    # bf16 matmul inputs (f32 accumulation) -> compare against the f32 reference
    # with a bf16-appropriate tolerance.
    err = float(jnp.max(jnp.abs(out - ref)))
    assert jnp.allclose(out, ref, atol=3e-2, rtol=3e-2), err

    print("KERNEL_OK")
</pallas_src>

<mosaic_0001>
module attributes {stable_mosaic.version = 11 : i64} {
  func.func @_stats_kernel(%arg0: i32, %arg1: i32, %arg2: memref<16x32xf32, #tpu.memory_space<vmem>>, %arg3: memref<32x512xbf16, #tpu.memory_space<vmem>>, %arg4: memref<16x1xbf16, #tpu.memory_space<vmem>>, %arg5: memref<1x512xf32, #tpu.memory_space<vmem>>, %arg6: memref<1x512xf32, #tpu.memory_space<vmem>>) attributes {dimension_semantics = [#tpu.dimension_semantics<parallel>, #tpu.dimension_semantics<arbitrary>], iteration_bounds = array<i64: 1, 1>, scalar_prefetch = 0 : i64, scratch_operands = 0 : i64, tpu.core_type = #tpu.core_type<tc>, window_params = [{transform_indices = @transform_0, window_bounds = array<i64: 16, 32>}, {pipeline_mode = #tpu.pipeline_mode<synchronous>, transform_indices = @transform_1, window_bounds = array<i64: 32, 512>}, {transform_indices = @transform_2, window_bounds = array<i64: 16, 1>}, {transform_indices = @transform_3, window_bounds = array<i64: 1, 512>}, {transform_indices = @transform_4, window_bounds = array<i64: 1, 512>}]} {
    %c0_i32 = arith.constant 0 : i32
    %0 = arith.cmpi eq, %arg1, %c0_i32 : i32
    %1 = arith.extui %0 : i1 to i32
    %c0_i32_0 = arith.constant 0 : i32
    %2 = arith.cmpi ne, %1, %c0_i32_0 : i32
    scf.if %2 {
      %cst_16 = arith.constant 0.000000e+00 : f32
      %21 = vector.broadcast %cst_16 : f32 to vector<1x512xf32>
      %c0_17 = arith.constant 0 : index
      %c0_18 = arith.constant 0 : index
      %22 = vector.load %arg5[%c0_17, %c0_18] : memref<1x512xf32, #tpu.memory_space<vmem>>, vector<1x512xf32>
      tpu.vector_store %arg5[%c0_17, %c0_18], %21 {strides = array<i32>} : memref<1x512xf32, #tpu.memory_space<vmem>>, vector<1x512xf32>,
      %cst_19 = arith.constant 0.000000e+00 : f32
      %23 = vector.broadcast %cst_19 : f32 to vector<1x512xf32>
      %c0_20 = arith.constant 0 : index
      %c0_21 = arith.constant 0 : index
      %24 = vector.load %arg6[%c0_20, %c0_21] : memref<1x512xf32, #tpu.memory_space<vmem>>, vector<1x512xf32>
      tpu.vector_store %arg6[%c0_20, %c0_21], %23 {strides = array<i32>} : memref<1x512xf32, #tpu.memory_space<vmem>>, vector<1x512xf32>,
    } else {
    }
    %c0 = arith.constant 0 : index
    %c0_1 = arith.constant 0 : index
    %3 = vector.load %arg2[%c0, %c0_1] : memref<16x32xf32, #tpu.memory_space<vmem>>, vector<16x32xf32>
    %4 = arith.truncf %3 : vector<16x32xf32> to vector<16x32xbf16>
    %c0_2 = arith.constant 0 : index
    %c0_3 = arith.constant 0 : index
    %5 = vector.load %arg4[%c0_2, %c0_3] : memref<16x1xbf16, #tpu.memory_space<vmem>>, vector<16x1xbf16>
    %6 = vector.broadcast %5 : vector<16x1xbf16> to vector<16x32xbf16>
    %7 = arith.mulf %4, %6 : vector<16x32xbf16>
    %c0_4 = arith.constant 0 : index
    %c0_5 = arith.constant 0 : index
    %8 = vector.load %arg3[%c0_4, %c0_5] : memref<32x512xbf16, #tpu.memory_space<vmem>>, vector<32x512xbf16>
    %cst = arith.constant dense<0.000000e+00> : vector<16x512xf32>
    %9 = tpu.matmul %7, %8, %cst {dimension_numbers = #tpu.dot_dimension_numbers<[1], [0], [0], [1], [0, 0, 1, 1], [], []>} : vector<16x32xbf16>, vector<32x512xbf16>, vector<16x512xf32> -> vector<16x512xf32>
    %c0_6 = arith.constant 0 : index
    %c0_7 = arith.constant 0 : index
    %10 = vector.load %arg5[%c0_6, %c0_7] : memref<1x512xf32, #tpu.memory_space<vmem>>, vector<1x512xf32>
    %cst_8 = arith.constant dense<0.000000e+00> : vector<512xf32>
    %11 = vector.multi_reduction <add>, %9, %cst_8 [0] : vector<16x512xf32> to vector<512xf32>
    %12 = vector.shape_cast %11 : vector<512xf32> to vector<1x512xf32>
    %13 = arith.addf %10, %12 : vector<1x512xf32>
    %c0_9 = arith.constant 0 : index
    %c0_10 = arith.constant 0 : index
    %14 = vector.load %arg5[%c0_9, %c0_10] : memref<1x512xf32, #tpu.memory_space<vmem>>, vector<1x512xf32>
    tpu.vector_store %arg5[%c0_9, %c0_10], %13 {strides = array<i32>} : memref<1x512xf32, #tpu.memory_space<vmem>>, vector<1x512xf32>,
    %c0_11 = arith.constant 0 : index
    %c0_12 = arith.constant 0 : index
    %15 = vector.load %arg6[%c0_11, %c0_12] : memref<1x512xf32, #tpu.memory_space<vmem>>, vector<1x512xf32>
    %16 = arith.mulf %9, %9 : vector<16x512xf32>
    %cst_13 = arith.constant dense<0.000000e+00> : vector<512xf32>
    %17 = vector.multi_reduction <add>, %16, %cst_13 [0] : vector<16x512xf32> to vector<512xf32>
    %18 = vector.shape_cast %17 : vector<512xf32> to vector<1x512xf32>
    %19 = arith.addf %15, %18 : vector<1x512xf32>
    %c0_14 = arith.constant 0 : index
    %c0_15 = arith.constant 0 : index
    %20 = vector.load %arg6[%c0_14, %c0_15] : memref<1x512xf32, #tpu.memory_space<vmem>>, vector<1x512xf32>
    tpu.vector_store %arg6[%c0_14, %c0_15], %19 {strides = array<i32>} : memref<1x512xf32, #tpu.memory_space<vmem>>, vector<1x512xf32>,
    return
  }
  func.func @transform_0(%arg0: i32, %arg1: i32) -> (i32, i32) {
    %c1_i32 = arith.constant 1 : i32
    %0 = arith.muli %arg0, %c1_i32 : i32
    %1 = arith.addi %0, %arg1 : i32
    %c0_i32 = arith.constant 0 : i32
    %c0_i32_0 = arith.constant 0 : i32
    return %1, %c0_i32 : i32, i32
  }
  func.func @transform_1(%arg0: i32, %arg1: i32) -> (i32, i32) {
    %c0_i32 = arith.constant 0 : i32
    %c0_i32_0 = arith.constant 0 : i32
    %c0_i32_1 = arith.constant 0 : i32
    return %c0_i32, %c0_i32_0 : i32, i32
  }
  func.func @transform_2(%arg0: i32, %arg1: i32) -> (i32, i32) {
    %c1_i32 = arith.constant 1 : i32
    %0 = arith.muli %arg0, %c1_i32 : i32
    %1 = arith.addi %0, %arg1 : i32
    %c0_i32 = arith.constant 0 : i32
    %c0_i32_0 = arith.constant 0 : i32
    return %1, %c0_i32 : i32, i32
  }
  func.func @transform_3(%arg0: i32, %arg1: i32) -> (i32, i32) {
    %c0_i32 = arith.constant 0 : i32
    %c0_i32_0 = arith.constant 0 : i32
    return %c0_i32, %arg0 : i32, i32
  }
  func.func @transform_4(%arg0: i32, %arg1: i32) -> (i32, i32) {
    %c0_i32 = arith.constant 0 : i32
    %c0_i32_0 = arith.constant 0 : i32
    return %c0_i32, %arg0 : i32, i32
  }
}

</mosaic_0001>

<llo_original>
// kernel: tpu_custom_call.1
$region0: #{tpu_custom_call.1}
  #allocation0 [shape = 'u32[]', space=smem, size = 0x4, offset = 0x4, fixed_abs, tag = 'smem constant byte address 0x4 - core index']
  #allocation1 [shape = 'u32[144,128]{1,0:T(1,128)}', space=vmem, size = 0x12000, scoped, tag = 'internal scratch']
  %s0 = inlined_call_operand.hbm [shape: f32[16,32], index: 0, kind: input, shape index: {}]
  %s1 = inlined_call_operand.hbm [shape: bf16[32,512], index: 1, kind: input, shape index: {}]
  %s2 = inlined_call_operand.vmem [shape: bf16[16,1], index: 2, kind: input, shape index: {}]
  %s3 = inlined_call_operand.hbm [shape: f32[1,512], index: 3, kind: output, shape index: {0}]
  %s4 = inlined_call_operand.hbm [shape: f32[1,512], index: 4, kind: output, shape index: {1}]
  %5 = xla_tuple %s3, %s4
  %s6 = sld [smem:[#allocation0]]
  $region42: #{tpu_custom_call.1} parent=0
    _
  %s8 = ssub.s32 1, %s6
  %s9 = scalar_select 0, %s8, %s6
  $region1: #{tpu_custom_call.1} parent=0
    #allocation2 [shape = 'u8[8192]{0}', space=vmem, size = 0x2000, scoped, tag = 'input window, operand 0, single buffered']
    #allocation3 [shape = 's32[1]{0}', space=sflag, size = 0x4, scoped, tag = 'scoped memory for tpu_custom_call.1']
    #allocation4 [shape = 's32[1]{0}', space=sflag, size = 0x4, scoped, tag = 'scoped memory for tpu_custom_call.1']
    #allocation5 [shape = 'u8[32768]{0}', space=vmem, size = 0x8000, scoped, tag = 'input window, operand 1, single buffered']
    #allocation6 [shape = 's32[1]{0}', space=sflag, size = 0x4, scoped, tag = 'scoped memory for tpu_custom_call.1']
    #allocation7 [shape = 'u8[2048]{0}', space=vmem, size = 0x800, scoped, tag = 'output window, operand 0, single buffered']
    #allocation8 [shape = 'u8[2048]{0}', space=vmem, size = 0x800, scoped, tag = 'output window, operand 1, single buffered']
    #allocation9 [shape = 's32[1]{0}', space=sflag, size = 0x4, scoped, tag = 'scoped memory for tpu_custom_call.1']
    %10 = vsyncpa [#allocation3], 0
    %11 = vsyncpa [#allocation6], 0
    %12 = vsyncpa [#allocation4], 0
    %13 = vsyncpa [#allocation9], 0
    // Predicated region
    $region2: #{tpu_custom_call.1} parent=1 // pred_check
      _
    $region3: #{tpu_custom_call.1} parent=1 // pred_check_branch
      %15 = sbr.rel (0) target = $region5
    $region4: #{tpu_custom_call.1} parent=1 // pred_region
      %s16 = sadd.s32 0, 0
      %s17 = smul.u32 2, %s16
      %s19 = ssub.s32 256, 256
      %20 = vsyncadd [#allocation3], %s19
      %s21 = smul.addr %s17, 128
      %s22 = scalar_lea.hbm %s0, %s21
      %s23 = sshll.u32 [#allocation2], 4
      %s24 = int_to_ptr.vmem [resolvable:$true] %s23
      %29 = dma.hbm_to_vmem [thread:$0]  %s22, 256, %s24, [#allocation3], 128, 128, 8
    $region5: #{tpu_custom_call.1} parent=1 // pred_fallthru
      _
    // Predicated region
    $region6: #{tpu_custom_call.1} parent=1 // pred_check
      _
    $region7: #{tpu_custom_call.1} parent=1 // pred_check_branch
      %31 = sbr.rel (0) target = $region9
    $region8: #{tpu_custom_call.1} parent=1 // pred_region
      %s33 = ssub.s32 1024, 1024
      %34 = vsyncadd [#allocation6], %s33
      %s35 = sshll.u32 [#allocation5], 4
      %s36 = int_to_ptr.vmem [resolvable:$true] %s35
      %41 = dma.hbm_to_vmem [thread:$0]  %s1, 1024, %s36, [#allocation6], 256, 256, 16
    $region9: #{tpu_custom_call.1} parent=1 // pred_fallthru
      _
    // Predicated region
    $region10: #{tpu_custom_call.1} parent=1 // pred_check
      _
    $region11: #{tpu_custom_call.1} parent=1 // pred_check_branch
      %43 = sbr.rel (0) target = $region13
    $region12: #{tpu_custom_call.1} parent=1 // pred_region
      %s44 = sadd.s32 0, 0
      %s45 = smul.u32 2, %s44
      %p46 = scmp.lt.s32.totalorder %s45, 1
      %s47 = scalar_select %p46, %s45, 1
      %s48 = smul.addr %s47, 4
      %s49 = scalar_lea.vmem %s2, %s48
      %s50 = sadd.s32 0, 0
      %s51 = smul.u32 2, %s50
    $region13: #{tpu_custom_call.1} parent=1 // pred_fallthru
      _
    // Predicated region
    $region14: #{tpu_custom_call.1} parent=1 // pred_check
      _
    $region15: #{tpu_custom_call.1} parent=1 // pred_check_branch
      %53 = sbr.rel (0) target = $region17
    $region16: #{tpu_custom_call.1} parent=1 // pred_region
      %54 = dma.done [#allocation3], 256
    $region17: #{tpu_custom_call.1} parent=1 // pred_fallthru
      _
    // Predicated region
    $region18: #{tpu_custom_call.1} parent=1 // pred_check
      _
    $region19: #{tpu_custom_call.1} parent=1 // pred_check_branch
      %56 = sbr.rel (0) target = $region21
    $region20: #{tpu_custom_call.1} parent=1 // pred_region
      %57 = dma.done [#allocation6], 1024
    $region21: #{tpu_custom_call.1} parent=1 // pred_fallthru
      _
    %s58 = sadd.s32 0, 0
    %s59 = smul.u32 2, %s58
    %p60 = scmp.lt.s32.totalorder %s59, 1
    %s61 = scalar_select %p60, %s59, 1
    %s62 = smul.addr %s61, 4
    %s63 = scalar_lea.vmem %s2, %s62
    %s64 = sadd.s32 0, 0
    %s65 = smul.u32 2, %s64
    %s66 = sadd.s32 0, 0
    %s67 = smul.u32 2, %s66
    %p68 = scmp.lt.s32.totalorder %s67, 1
    %s69 = scalar_select %p68, %s67, 1
    %s70 = smul.addr %s69, 4
    %s71 = scalar_lea.vmem %s2, %s70
    %s72 = sadd.s32 0, 0
    %s73 = smul.u32 2, %s72
    %p75 = scmp.eq.s32.totalorder 0, 0
    // Predicated region
    $region22: #{tpu_custom_call.1} parent=1 // pred_check
      %p76 = pneg %p75
    $region23: #{tpu_custom_call.1} parent=1 // pred_check_branch
      %78 = sbr.rel (%p76) target = $region25
    $region24: #{tpu_custom_call.1} parent=1 // pred_region
      %v79 = vlaneseq
      %vm80 = vcmp.ge.s32.totalorder %v79, 0
      %vm81 = vcmp.lt.s32.totalorder %v79, 512
      %vm82 = vmand %vm80, %vm81
      %83 = vst.msk [vmem:[#allocation7] sm:$0xf] %vm82, 0.0
      %84 = vst.msk [vmem:[#allocation8] sm:$0xf] %vm82, 0.0
    $region25: #{tpu_custom_call.1} parent=1 // pred_fallthru
      _
    %v85 = vld [vmem:[#allocation2] sm:$0xff]
    %v86 = vld [vmem:[#allocation2 + $0x8] sm:$0xff]
    %v87 = vpack.c.bf16 %v86, %v85
    %v88 = vld [vmem:[%s71] sm:$0xf]
    %v89 = vld [vmem:[%s71 + $0x4] sm:$0xf]
    %91 = vset.pattern.permute.xlu0 0
    %92 = vperm.xlu0 %91, %v88
    %v93 = vpop.permute.xlu0 %92
    %v96 = vunpack.c.l.s4 839922192
    %v97 = vunpack.c.0.s8 %v96
    %v98 = vlaneseq
    %v99 = vshrl.u32 %v98, 7
    %v100 = vsub.s32 %v97, %v99
    %v101 = vrot.slane %v93, %v100
    %103 = vset.pattern.permute.xlu0 0
    %104 = vperm.xlu0 %103, %v89
    %v105 = vpop.permute.xlu0 %104
    %v108 = vunpack.c.l.s4 839922192
    %v109 = vunpack.c.0.s8 %v108
    %v110 = vlaneseq
    %v111 = vshrl.u32 %v110, 7
    %v112 = vsub.s32 %v109, %v111
    %v113 = vrot.slane %v105, %v112
    %v116 = vunpack.c.l.b16 %v101
    %v117 = vunpack.c.l.b16 %v113
    %v118 = vpack.c.b16 %v117, %v116
    %v120 = vmul.bf16 %v87, %v118
    %v121 = vld [vmem:[#allocation5] sm:$0xff]
    %v122 = vld [vmem:[#allocation5 + $0x8] sm:$0xff]
    %v123 = vld [vmem:[#allocation5 + $0x10] sm:$0xff]
    %v124 = vld [vmem:[#allocation5 + $0x18] sm:$0xff]
    %v125 = vld [vmem:[#allocation5 + $0x20] sm:$0xff]
    %v126 = vld [vmem:[#allocation5 + $0x28] sm:$0xff]
    %v127 = vld [vmem:[#allocation5 + $0x30] sm:$0xff]
    %v128 = vld [vmem:[#allocation5 + $0x38] sm:$0xff]
    %v137 = vunpack.c.l.b16 %v121
    %v138 = vunpack.c.h.b16 %v121
    %v139 = vunpack.c.l.b16 %v122
    %v140 = vunpack.c.h.b16 %v122
    %v141 = vunpack.c.l.b16 %v123
    %v142 = vunpack.c.h.b16 %v123
    %v143 = vunpack.c.l.b16 %v124
    %v144 = vunpack.c.h.b16 %v124
    %v145 = vunpack.c.l.b16 %v125
    %v146 = vunpack.c.h.b16 %v125
    %v147 = vunpack.c.l.b16 %v126
    %v148 = vunpack.c.h.b16 %v126
    %v149 = vunpack.c.l.b16 %v127
    %v150 = vunpack.c.h.b16 %v127
    %v151 = vunpack.c.l.b16 %v128
    %v152 = vunpack.c.h.b16 %v128
    %v153 = vpack.c.b16 %v141, %v137
    %v154 = vpack.c.b16 %v142, %v138
    %v155 = vpack.c.b16 %v143, %v139
    %v156 = vpack.c.b16 %v144, %v140
    %v157 = vpack.c.b16 %v149, %v145
    %v158 = vpack.c.b16 %v150, %v146
    %v159 = vpack.c.b16 %v151, %v147
    %v160 = vpack.c.b16 %v152, %v148
    %vm169 = vcmask 261120
    %v171 = vsel %vm169, %v120, 0
    %173 = vmatprep.subr.bf16.mxu0 %v154
    %174 = vmatpush1.bf16.msra.mxu0 %v153
    %175 = vmatprep.subr.bf16.mxu0 %v158
    %176 = vmatpush1.bf16.msra.mxu0 %v157
    %177 = vmatprep.subr.bf16.mxu0 0
    %178 = vmatpush1.bf16.msra.mxu0 0
    %179 = vmatprep.subr.bf16.mxu0 0
    %180 = vmatpush1.bf16.msra.mxu0 0
    %181 = vmatprep.subr.bf16.mxu0 0
    %182 = vmatpush1.bf16.msra.mxu0 0
    %183 = vmatprep.subr.bf16.mxu0 0
    %184 = vmatpush1.bf16.msra.mxu0 0
    %185 = vmatprep.subr.bf16.mxu0 0
    %186 = vmatpush1.bf16.msra.mxu0 0
    %187 = vmatprep.subr.bf16.mxu0 0
    %188 = vmatpush1.bf16.msra.mxu0 0
    %189 = vmatprep.subr.bf16.mxu0 0
    %190 = vmatpush1.bf16.msra.mxu0 0
    %191 = vmatprep.subr.bf16.mxu0 0
    %192 = vmatpush1.bf16.msra.mxu0 0
    %193 = vmatprep.subr.bf16.mxu0 0
    %194 = vmatpush1.bf16.msra.mxu0 0
    %195 = vmatprep.subr.bf16.mxu0 0
    %196 = vmatpush1.bf16.msra.mxu0 0
    %197 = vmatprep.subr.bf16.mxu0 0
    %198 = vmatpush1.bf16.msra.mxu0 0
    %199 = vmatprep.subr.bf16.mxu0 0
    %200 = vmatpush1.bf16.msra.mxu0 0
    %201 = vmatprep.subr.bf16.mxu0 0
    %202 = vmatpush1.bf16.msra.mxu0 0
    %203 = vmatprep.subr.bf16.mxu0 0
    %204 = vmatpush1.bf16.msra.mxu0 0
    %205 = vmatprep.mubr.bf16.mxu0 0
    %206 = vmatmul.mubr.bf16.gmra.mrb[0].mxu0 %v171
    %v207 = vpop.f32.mrb[0].mxu0
    %v208 = vadd.f32 0.0, %v207
    %v209 = vpop.f32.mrb[0].mxu0
    %v210 = vadd.f32 0.0, %v209
    %v211 = vpop.f32.mrb[0].mxu0
    %v212 = vadd.f32 0.0, %v211
    %v213 = vpop.f32.mrb[0].mxu0
    %v214 = vadd.f32 0.0, %v213
    %215 = vdwg.mxu0
    %216 = vmatprep.subr.bf16.mxu0 %v156
    %217 = vmatpush1.bf16.msra.mxu0 %v155
    %218 = vmatprep.subr.bf16.mxu0 %v160
    %219 = vmatpush1.bf16.msra.mxu0 %v159
    %220 = vmatprep.subr.bf16.mxu0 0
    %221 = vmatpush1.bf16.msra.mxu0 0
    %222 = vmatprep.subr.bf16.mxu0 0
    %223 = vmatpush1.bf16.msra.mxu0 0
    %224 = vmatprep.subr.bf16.mxu0 0
    %225 = vmatpush1.bf16.msra.mxu0 0
    %226 = vmatprep.subr.bf16.mxu0 0
    %227 = vmatpush1.bf16.msra.mxu0 0
    %228 = vmatprep.subr.bf16.mxu0 0
    %229 = vmatpush1.bf16.msra.mxu0 0
    %230 = vmatprep.subr.bf16.mxu0 0
    %231 = vmatpush1.bf16.msra.mxu0 0
    %232 = vmatprep.subr.bf16.mxu0 0
    %233 = vmatpush1.bf16.msra.mxu0 0
    %234 = vmatprep.subr.bf16.mxu0 0
    %235 = vmatpush1.bf16.msra.mxu0 0
    %236 = vmatprep.subr.bf16.mxu0 0
    %237 = vmatpush1.bf16.msra.mxu0 0
    %238 = vmatprep.subr.bf16.mxu0 0
    %239 = vmatpush1.bf16.msra.mxu0 0
    %240 = vmatprep.subr.bf16.mxu0 0
    %241 = vmatpush1.bf16.msra.mxu0 0
    %242 = vmatprep.subr.bf16.mxu0 0
    %243 = vmatpush1.bf16.msra.mxu0 0
    %244 = vmatprep.subr.bf16.mxu0 0
    %245 = vmatpush1.bf16.msra.mxu0 0
    %246 = vmatprep.subr.bf16.mxu0 0
    %247 = vmatpush1.bf16.msra.mxu0 0
    %248 = vmatprep.mubr.bf16.mxu0 0
    %249 = vmatmul.mubr.bf16.gmra.mrb[0].mxu0 %v171
    %v250 = vpop.f32.mrb[0].mxu0
    %v251 = vadd.f32 0.0, %v250
    %v252 = vpop.f32.mrb[0].mxu0
    %v253 = vadd.f32 0.0, %v252
    %v254 = vpop.f32.mrb[0].mxu0
    %v255 = vadd.f32 0.0, %v254
    %v256 = vpop.f32.mrb[0].mxu0
    %v257 = vadd.f32 0.0, %v256
    %258 = vdwg.mxu0
    %v259 = vld [vmem:[#allocation7] sm:$0xf]
    %v260 = vadd.f32 %v208, %v212
    %v261 = vrot.slane %v260, 4
    %v262 = vadd.f32 %v260, %v261
    %v263 = vrot.slane %v262, 2
    %v264 = vadd.f32 %v262, %v263
    %v265 = vrot.slane %v264, 1
    %v266 = vadd.f32 %v264, %v265
    %v267 = vadd.f32 %v210, %v214
    %v268 = vrot.slane %v267, 4
    %v269 = vadd.f32 %v267, %v268
    %v270 = vrot.slane %v269, 2
    %v271 = vadd.f32 %v269, %v270
    %v272 = vrot.slane %v271, 1
    %v273 = vadd.f32 %v271, %v272
    %v274 = vadd.f32 %v251, %v255
    %v275 = vrot.slane %v274, 4
    %v276 = vadd.f32 %v274, %v275
    %v277 = vrot.slane %v276, 2
    %v278 = vadd.f32 %v276, %v277
    %v279 = vrot.slane %v278, 1
    %v280 = vadd.f32 %v278, %v279
    %v281 = vadd.f32 %v253, %v257
    %v282 = vrot.slane %v281, 4
    %v283 = vadd.f32 %v281, %v282
    %v284 = vrot.slane %v283, 2
    %v285 = vadd.f32 %v283, %v284
    %v286 = vrot.slane %v285, 1
    %v287 = vadd.f32 %v285, %v286
    %v292 = vcombine.low %v266, %v273
    %v293 = vcombine.low %v280, %v287
    %v295 = vunpack.c.l.s4 1966171168
    %v296 = vunpack.c.0.s8 %v295
    %v297 = vlaneseq
    %v298 = vshrl.u32 %v297, 7
    %v299 = vsub.s32 %v296, %v298
    %v300 = vrot.slane %v292, %v299
    %v302 = vunpack.c.l.s4 1966171168
    %v303 = vunpack.c.0.s8 %v302
    %v304 = vlaneseq
    %v305 = vshrl.u32 %v304, 7
    %v306 = vsub.s32 %v303, %v305
    %v307 = vrot.slane %v293, %v306
    %v308 = vcombine.low %v300, %v307
    %v310 = vunpack.c.l.s4 1966171168
    %v311 = vunpack.c.0.s8 %v310
    %v312 = vlaneseq
    %v313 = vshrl.u32 %v312, 7
    %v314 = vsub.s32 %v311, %v313
    %v315 = vrot.slane %v308, %v314
    %v317 = vadd.f32 %v259, %v315
    %v318 = vlaneseq
    %vm319 = vcmp.ge.s32.totalorder %v318, 0
    %vm320 = vcmp.lt.s32.totalorder %v318, 512
    %vm321 = vmand %vm319, %vm320
    %322 = vst.msk [vmem:[#allocation7] sm:$0xf] %vm321, %v317
    %v323 = vld [vmem:[#allocation8] sm:$0xf]
    %v324 = vmul.f32 %v208, %v208
    %v325 = vmul.f32 %v210, %v210
    %v326 = vmul.f32 %v251, %v251
    %v327 = vmul.f32 %v253, %v253
    %v328 = vmul.f32 %v212, %v212
    %v329 = vmul.f32 %v214, %v214
    %v330 = vmul.f32 %v255, %v255
    %v331 = vmul.f32 %v257, %v257
    %v332 = vadd.f32 %v324, %v328
    %v333 = vrot.slane %v332, 4
    %v334 = vadd.f32 %v332, %v333
    %v335 = vrot.slane %v334, 2
    %v336 = vadd.f32 %v334, %v335
    %v337 = vrot.slane %v336, 1
    %v338 = vadd.f32 %v336, %v337
    %v339 = vadd.f32 %v325, %v329
    %v340 = vrot.slane %v339, 4
    %v341 = vadd.f32 %v339, %v340
    %v342 = vrot.slane %v341, 2
    %v343 = vadd.f32 %v341, %v342
    %v344 = vrot.slane %v343, 1
    %v345 = vadd.f32 %v343, %v344
    %v346 = vadd.f32 %v326, %v330
    %v347 = vrot.slane %v346, 4
    %v348 = vadd.f32 %v346, %v347
    %v349 = vrot.slane %v348, 2
    %v350 = vadd.f32 %v348, %v349
    %v351 = vrot.slane %v350, 1
    %v352 = vadd.f32 %v350, %v351
    %v353 = vadd.f32 %v327, %v331
    %v354 = vrot.slane %v353, 4
    %v355 = vadd.f32 %v353, %v354
    %v356 = vrot.slane %v355, 2
    %v357 = vadd.f32 %v355, %v356
    %v358 = vrot.slane %v357, 1
    %v359 = vadd.f32 %v357, %v358
    %v364 = vcombine.low %v338, %v345
    %v365 = vcombine.low %v352, %v359
    %v367 = vunpack.c.l.s4 1966171168
    %v368 = vunpack.c.0.s8 %v367
    %v369 = vlaneseq
    %v370 = vshrl.u32 %v369, 7
    %v371 = vsub.s32 %v368, %v370
    %v372 = vrot.slane %v364, %v371
    %v374 = vunpack.c.l.s4 1966171168
    %v375 = vunpack.c.0.s8 %v374
    %v376 = vlaneseq
    %v377 = vshrl.u32 %v376, 7
    %v378 = vsub.s32 %v375, %v377
    %v379 = vrot.slane %v365, %v378
    %v380 = vcombine.low %v372, %v379
    %v382 = vunpack.c.l.s4 1966171168
    %v383 = vunpack.c.0.s8 %v382
    %v384 = vlaneseq
    %v385 = vshrl.u32 %v384, 7
    %v386 = vsub.s32 %v383, %v385
    %v387 = vrot.slane %v380, %v386
    %v389 = vadd.f32 %v323, %v387
    %390 = vst.msk [vmem:[#allocation8] sm:$0xf] %vm321, %v389
    // Predicated region
    $region26: #{tpu_custom_call.1} parent=1 // pred_check
      _
    $region27: #{tpu_custom_call.1} parent=1 // pred_check_branch
      %392 = sbr.rel (0) target = $region29
    $region28: #{tpu_custom_call.1} parent=1 // pred_region
      %s394 = ssub.s32 64, 64
      %395 = vsyncadd [#allocation4], %s394
      %s397 = sshll.u32 [#allocation7], 4
      %s398 = int_to_ptr.vmem [resolvable:$true] %s397
      %400 = dma.vmem_to_hbm [thread:$0]  %s398, 64, %s3, [#allocation4]
    $region29: #{tpu_custom_call.1} parent=1 // pred_fallthru
      _
    // Predicated region
    $region30: #{tpu_custom_call.1} parent=1 // pred_check
      _
    $region31: #{tpu_custom_call.1} parent=1 // pred_check_branch
      %402 = sbr.rel (0) target = $region33
    $region32: #{tpu_custom_call.1} parent=1 // pred_region
      %s404 = ssub.s32 64, 64
      %405 = vsyncadd [#allocation9], %s404
      %s407 = sshll.u32 [#allocation8], 4
      %s408 = int_to_ptr.vmem [resolvable:$true] %s407
      %410 = dma.vmem_to_hbm [thread:$0]  %s408, 64, %s4, [#allocation9]
    $region33: #{tpu_custom_call.1} parent=1 // pred_fallthru
      _
    // Predicated region
    $region34: #{tpu_custom_call.1} parent=1 // pred_check
      _
    $region35: #{tpu_custom_call.1} parent=1 // pred_check_branch
      %412 = sbr.rel (0) target = $region37
    $region36: #{tpu_custom_call.1} parent=1 // pred_region
      %413 = dma.done [#allocation4], 64
    $region37: #{tpu_custom_call.1} parent=1 // pred_fallthru
      _
    // Predicated region
    $region38: #{tpu_custom_call.1} parent=1 // pred_check
      _
    $region39: #{tpu_custom_call.1} parent=1 // pred_check_branch
      %415 = sbr.rel (0) target = $region41
    $region40: #{tpu_custom_call.1} parent=1 // pred_region
      %416 = dma.done [#allocation9], 64
    $region41: #{tpu_custom_call.1} parent=1 // pred_fallthru
      _
    %417 = vsyncpa [#allocation3], 1
    %418 = vsyncpa [#allocation6], 1
    %419 = vsyncpa [#allocation4], 1
    %420 = vsyncpa [#allocation9], 1

</llo_original>
